<compile_context>
chip_gen: v7x
topology: tpu7x:2x2x1
jax: 0.10.0
libtpu: 0.0.40
codegen_flags: <defaults>
</compile_context>

<pallas_src>
import jax
import jax.numpy as jnp
from jax import lax
from jax.experimental import pallas as pl
from jax.experimental.pallas import tpu as pltpu


# ----------------------------- Pallas kernel --------------------------------
def ffm_kernel(p_ref, w_ref, b_ref, wdT_ref, bd_ref, wu_ref, bu_ref, o_ref):
    # p_ref : (1, M, K)     im2col patches (M = H*W, K = 9*Cin), bf16
    # w_ref : (K, Cout)     folded 3x3 (+1x1 center tap) conv weights, bf16
    # b_ref : (1, Cout)     folded conv+BN bias, f32
    # wdT   : (Cred, Cout)  SE squeeze weight (transposed), f32
    # bd    : (Cred, 1)     SE squeeze bias, f32
    # wu    : (Cred, Cout)  SE excite weight, f32
    # bu    : (1, Cout)     SE excite bias, f32
    # o_ref : (1, M, Cout)  output for one batch element

    # --- RepConvN: single K=9*Cin bf16 matmul on the MXU, f32 accumulate.
    acc = jnp.dot(p_ref[0], w_ref[...], preferred_element_type=jnp.float32)
    acc = acc + b_ref[...]
    y = acc * jax.nn.sigmoid(acc)                       # SiLU, f32

    # --- SEBlock, kept off the MXU (VPU multiplies + XLU reductions).
    pooled = jnp.mean(y, axis=0, keepdims=True)         # (1, Cout)  global avg pool
    hdn = jnp.maximum(                                  # (Cred, 1)  squeeze + ReLU
        jnp.sum(pooled * wdT_ref[...], axis=1, keepdims=True) + bd_ref[...], 0.0)
    gate = jax.nn.sigmoid(                              # (1, Cout)  excite + sigmoid
        jnp.sum(hdn * wu_ref[...], axis=0, keepdims=True) + bu_ref[...])

    # --- Residual: y + y * gate == y * (1 + gate), fused.
    o_ref[0] = (y * (gate + 1.0)).astype(o_ref.dtype)


# ------------------------------ wrapper --------------------------------------
def feature_fusion_nhwc(x_nhwc, params):
    w3, b3, w1, b1, wd, bd, wu, bu = params
    N, H, W, Cin = x_nhwc.shape
    Cout = w3.shape[-1]
    Cred = wd.shape[-1]
    K = 9 * Cin

    # --- parameter prep (cheap, done outside the kernel) ---
    # Fold the 1x1 branch into the 3x3 center tap (tap index 4 == dy=1, dx=1).
    w3f = w3.at[4].add(w1)                                  # (9, Cin, Cout)
    bias = (b3 + b1).astype(jnp.float32)                    # (1, Cout)
    w_flat = w3f.reshape(K, Cout).astype(jnp.bfloat16)      # (9*Cin, Cout) bf16

    wdT = wd.T.astype(jnp.float32)                          # (Cred, Cout)
    bd_col = bd.reshape(Cred, 1).astype(jnp.float32)        # (Cred, 1)
    wu_f = wu.astype(jnp.float32)                           # (Cred, Cout)
    bu_f = bu.astype(jnp.float32)                           # (1, Cout)

    # --- im2col: lane-dense (N, H*W, 9*Cin) bf16 patch matrix ---
    xp = jnp.pad(x_nhwc, ((0, 0), (1, 1), (1, 1), (0, 0)))  # SAME pad for 3x3
    taps = [xp[:, dy:dy + H, dx:dx + W, :]
            for dy in range(3) for dx in range(3)]          # tap index dy*3+dx
    patches = jnp.concatenate(taps, axis=-1)                # (N, H, W, 9*Cin)
    patches = patches.reshape(N, H * W, K).astype(jnp.bfloat16)

    out_flat = pl.pallas_call(
        ffm_kernel,
        out_shape=jax.ShapeDtypeStruct((N, H * W, Cout), x_nhwc.dtype),
        grid_spec=pltpu.PrefetchScalarGridSpec(
            num_scalar_prefetch=0,
            grid=(N,),
            in_specs=[
                pl.BlockSpec((1, H * W, K), lambda n: (n, 0, 0)),
                pl.BlockSpec((K, Cout), lambda n: (0, 0)),
                pl.BlockSpec((1, Cout), lambda n: (0, 0)),
                pl.BlockSpec((Cred, Cout), lambda n: (0, 0)),
                pl.BlockSpec((Cred, 1), lambda n: (0, 0)),
                pl.BlockSpec((Cred, Cout), lambda n: (0, 0)),
                pl.BlockSpec((1, Cout), lambda n: (0, 0)),
            ],
            out_specs=pl.BlockSpec((1, H * W, Cout), lambda n: (n, 0, 0)),
        ),
        compiler_params=pltpu.CompilerParams(
            dimension_semantics=("parallel",)),
    )(patches, w_flat, bias, wdT, bd_col, wu_f, bu_f)

    return out_flat.reshape(N, H, W, Cout)


# --------------------------- pure-JAX reference -------------------------------
def feature_fusion_ref(x_nhwc, params):
    w3, b3, w1, b1, wd, bd, wu, bu = params
    Cin, Cout = w1.shape
    w3_hwio = w3.reshape(3, 3, Cin, Cout)
    w1_hwio = w1.reshape(1, 1, Cin, Cout)
    dn = ("NHWC", "HWIO", "NHWC")
    y = (lax.conv_general_dilated(x_nhwc, w3_hwio, (1, 1), "SAME",
                                  dimension_numbers=dn) + b3[0]
         + lax.conv_general_dilated(x_nhwc, w1_hwio, (1, 1), "SAME",
                                    dimension_numbers=dn) + b1[0])
    y = y * jax.nn.sigmoid(y)
    pooled = jnp.mean(y, axis=(1, 2))                       # (N, Cout)
    hdn = jax.nn.relu(pooled @ wd + bd[0])
    gate = jax.nn.sigmoid(hdn @ wu + bu[0])
    return y + y * gate[:, None, None, :]


# ------------------------------- main -----------------------------------------
if __name__ == "__main__":
    N, Cin, H, W = 2, 16, 16, 16
    Cout = 128               # realistic BiSeNet FFM width; lane-dense output
    Cred = Cout // 16        # SEBlock internal neurons

    key = jax.random.PRNGKey(0)
    ks = jax.random.split(key, 9)

    # Deterministic synthetic parameters (BN folded -> plain conv + bias).
    w3 = jax.random.normal(ks[0], (9, Cin, Cout), jnp.float32) * 0.1
    b3 = jax.random.normal(ks[1], (1, Cout), jnp.float32) * 0.1
    w1 = jax.random.normal(ks[2], (Cin, Cout), jnp.float32) * 0.1
    b1 = jax.random.normal(ks[3], (1, Cout), jnp.float32) * 0.1
    wd = jax.random.normal(ks[4], (Cout, Cred), jnp.float32) * 0.1
    bd = jax.random.normal(ks[5], (1, Cred), jnp.float32) * 0.1
    wu = jax.random.normal(ks[6], (Cred, Cout), jnp.float32) * 0.1
    bu = jax.random.normal(ks[7], (1, Cout), jnp.float32) * 0.1
    params = (w3, b3, w1, b1, wd, bd, wu, bu)

    # Input built NCHW (PyTorch convention), converted to NHWC for the kernel.
    x_nchw = jax.random.normal(ks[8], (N, Cin, H, W), jnp.float32)
    x_nhwc = jnp.transpose(x_nchw, (0, 2, 3, 1))

    out = feature_fusion_nhwc(x_nhwc, params)
    out = jax.block_until_ready(out)

    ref = feature_fusion_ref(x_nhwc, params)
    assert out.shape == (N, H, W, Cout)
    # bf16 MXU inputs with f32 accumulation -> slightly looser tolerance.
    assert jnp.allclose(out, ref, rtol=2e-2, atol=2e-2), (
        float(jnp.max(jnp.abs(out - ref))))

    print("KERNEL_OK")
</pallas_src>

<mosaic_0001>
module attributes {stable_mosaic.version = 11 : i64} {
  func.func @ffm_kernel(%arg0: i32, %arg1: memref<1x256x144xbf16, #tpu.memory_space<vmem>>, %arg2: memref<144x128xbf16, #tpu.memory_space<vmem>>, %arg3: memref<1x128xf32, #tpu.memory_space<vmem>>, %arg4: memref<8x128xf32, #tpu.memory_space<vmem>>, %arg5: memref<8x1xf32, #tpu.memory_space<vmem>>, %arg6: memref<8x128xf32, #tpu.memory_space<vmem>>, %arg7: memref<1x128xf32, #tpu.memory_space<vmem>>, %arg8: memref<1x256x128xf32, #tpu.memory_space<vmem>>) attributes {dimension_semantics = [#tpu.dimension_semantics<parallel>], iteration_bounds = array<i64: 2>, scalar_prefetch = 0 : i64, scratch_operands = 0 : i64, tpu.core_type = #tpu.core_type<tc>, window_params = [{transform_indices = @transform_0, window_bounds = array<i64: 1, 256, 144>}, {pipeline_mode = #tpu.pipeline_mode<synchronous>, transform_indices = @transform_1, window_bounds = array<i64: 144, 128>}, {pipeline_mode = #tpu.pipeline_mode<synchronous>, transform_indices = @transform_2, window_bounds = array<i64: 1, 128>}, {pipeline_mode = #tpu.pipeline_mode<synchronous>, transform_indices = @transform_3, window_bounds = array<i64: 8, 128>}, {pipeline_mode = #tpu.pipeline_mode<synchronous>, transform_indices = @transform_4, window_bounds = array<i64: 8, 1>}, {pipeline_mode = #tpu.pipeline_mode<synchronous>, transform_indices = @transform_5, window_bounds = array<i64: 8, 128>}, {pipeline_mode = #tpu.pipeline_mode<synchronous>, transform_indices = @transform_6, window_bounds = array<i64: 1, 128>}, {transform_indices = @transform_7, window_bounds = array<i64: 1, 256, 128>}]} {
    %c0 = arith.constant 0 : index
    %c0_0 = arith.constant 0 : index
    %c0_1 = arith.constant 0 : index
    %0 = vector.load %arg1[%c0, %c0_0, %c0_1] : memref<1x256x144xbf16, #tpu.memory_space<vmem>>, vector<1x256x144xbf16>
    %1 = vector.shape_cast %0 : vector<1x256x144xbf16> to vector<256x144xbf16>
    %c0_2 = arith.constant 0 : index
    %c0_3 = arith.constant 0 : index
    %2 = vector.load %arg2[%c0_2, %c0_3] : memref<144x128xbf16, #tpu.memory_space<vmem>>, vector<144x128xbf16>
    %cst = arith.constant dense<0.000000e+00> : vector<256x128xf32>
    %3 = tpu.matmul %1, %2, %cst {dimension_numbers = #tpu.dot_dimension_numbers<[1], [0], [0], [1], [0, 0, 1, 1], [], []>} : vector<256x144xbf16>, vector<144x128xbf16>, vector<256x128xf32> -> vector<256x128xf32>
    %c0_4 = arith.constant 0 : index
    %c0_5 = arith.constant 0 : index
    %4 = vector.load %arg3[%c0_4, %c0_5] : memref<1x128xf32, #tpu.memory_space<vmem>>, vector<1x128xf32>
    %5 = vector.broadcast %4 : vector<1x128xf32> to vector<256x128xf32>
    %6 = arith.addf %3, %5 : vector<256x128xf32>
    %7 = arith.negf %6 : vector<256x128xf32>
    %8 = math.exp %7 : vector<256x128xf32>
    %cst_6 = arith.constant 1.000000e+00 : f32
    %9 = vector.broadcast %cst_6 : f32 to vector<256x128xf32>
    %10 = arith.addf %9, %8 : vector<256x128xf32>
    %11 = arith.divf %9, %10 : vector<256x128xf32>
    %12 = arith.mulf %6, %11 : vector<256x128xf32>
    %cst_7 = arith.constant dense<0.000000e+00> : vector<128xf32>
    %13 = vector.multi_reduction <add>, %12, %cst_7 [0] : vector<256x128xf32> to vector<128xf32>
    %14 = vector.shape_cast %13 : vector<128xf32> to vector<1x128xf32>
    %cst_8 = arith.constant 2.560000e+02 : f32
    %15 = vector.broadcast %cst_8 : f32 to vector<1x128xf32>
    %16 = arith.divf %14, %15 : vector<1x128xf32>
    %c0_9 = arith.constant 0 : index
    %c0_10 = arith.constant 0 : index
    %17 = vector.load %arg4[%c0_9, %c0_10] : memref<8x128xf32, #tpu.memory_space<vmem>>, vector<8x128xf32>
    %18 = vector.broadcast %16 : vector<1x128xf32> to vector<8x128xf32>
    %19 = arith.mulf %18, %17 : vector<8x128xf32>
    %cst_11 = arith.constant dense<0.000000e+00> : vector<8xf32>
    %20 = vector.multi_reduction <add>, %19, %cst_11 [1] : vector<8x128xf32> to vector<8xf32>
    %21 = vector.shape_cast %20 : vector<8xf32> to vector<8x1xf32>
    %c0_12 = arith.constant 0 : index
    %c0_13 = arith.constant 0 : index
    %22 = vector.load %arg5[%c0_12, %c0_13] : memref<8x1xf32, #tpu.memory_space<vmem>>, vector<8x1xf32>
    %23 = arith.addf %21, %22 : vector<8x1xf32>
    %cst_14 = arith.constant 0.000000e+00 : f32
    %24 = vector.broadcast %cst_14 : f32 to vector<8x1xf32>
    %25 = arith.maximumf %23, %24 : vector<8x1xf32>
    %c0_15 = arith.constant 0 : index
    %c0_16 = arith.constant 0 : index
    %26 = vector.load %arg6[%c0_15, %c0_16] : memref<8x128xf32, #tpu.memory_space<vmem>>, vector<8x128xf32>
    %27 = vector.broadcast %25 : vector<8x1xf32> to vector<8x128xf32>
    %28 = arith.mulf %27, %26 : vector<8x128xf32>
    %cst_17 = arith.constant dense<0.000000e+00> : vector<128xf32>
    %29 = vector.multi_reduction <add>, %28, %cst_17 [0] : vector<8x128xf32> to vector<128xf32>
    %30 = vector.shape_cast %29 : vector<128xf32> to vector<1x128xf32>
    %c0_18 = arith.constant 0 : index
    %c0_19 = arith.constant 0 : index
    %31 = vector.load %arg7[%c0_18, %c0_19] : memref<1x128xf32, #tpu.memory_space<vmem>>, vector<1x128xf32>
    %32 = arith.addf %30, %31 : vector<1x128xf32>
    %33 = arith.negf %32 : vector<1x128xf32>
    %34 = math.exp %33 : vector<1x128xf32>
    %cst_20 = arith.constant 1.000000e+00 : f32
    %35 = vector.broadcast %cst_20 : f32 to vector<1x128xf32>
    %36 = arith.addf %35, %34 : vector<1x128xf32>
    %37 = arith.divf %35, %36 : vector<1x128xf32>
    %cst_21 = arith.constant 1.000000e+00 : f32
    %38 = vector.broadcast %cst_21 : f32 to vector<1x128xf32>
    %39 = arith.addf %37, %38 : vector<1x128xf32>
    %40 = vector.broadcast %39 : vector<1x128xf32> to vector<256x128xf32>
    %41 = arith.mulf %12, %40 : vector<256x128xf32>
    %c0_22 = arith.constant 0 : index
    %c0_23 = arith.constant 0 : index
    %c0_24 = arith.constant 0 : index
    %42 = vector.load %arg8[%c0_22, %c0_23, %c0_24] : memref<1x256x128xf32, #tpu.memory_space<vmem>>, vector<1x256x128xf32>
    %43 = vector.shape_cast %42 : vector<1x256x128xf32> to vector<256x128xf32>
    %44 = vector.shape_cast %41 : vector<256x128xf32> to vector<1x256x128xf32>
    tpu.vector_store %arg8[%c0_22, %c0_23, %c0_24], %44 {strides = array<i32>} : memref<1x256x128xf32, #tpu.memory_space<vmem>>, vector<1x256x128xf32>,
    return
  }
  func.func @transform_0(%arg0: i32) -> (i32, i32, i32) {
    %c0_i32 = arith.constant 0 : i32
    %c0_i32_0 = arith.constant 0 : i32
    %c0_i32_1 = arith.constant 0 : i32
    return %arg0, %c0_i32, %c0_i32_0 : i32, i32, i32
  }
  func.func @transform_1(%arg0: i32) -> (i32, i32) {
    %c0_i32 = arith.constant 0 : i32
    %c0_i32_0 = arith.constant 0 : i32
    %c0_i32_1 = arith.constant 0 : i32
    return %c0_i32, %c0_i32_0 : i32, i32
  }
  func.func @transform_2(%arg0: i32) -> (i32, i32) {
    %c0_i32 = arith.constant 0 : i32
    %c0_i32_0 = arith.constant 0 : i32
    %c0_i32_1 = arith.constant 0 : i32
    return %c0_i32, %c0_i32_0 : i32, i32
  }
  func.func @transform_3(%arg0: i32) -> (i32, i32) {
    %c0_i32 = arith.constant 0 : i32
    %c0_i32_0 = arith.constant 0 : i32
    %c0_i32_1 = arith.constant 0 : i32
    return %c0_i32, %c0_i32_0 : i32, i32
  }
  func.func @transform_4(%arg0: i32) -> (i32, i32) {
    %c0_i32 = arith.constant 0 : i32
    %c0_i32_0 = arith.constant 0 : i32
    %c0_i32_1 = arith.constant 0 : i32
    return %c0_i32, %c0_i32_0 : i32, i32
  }
  func.func @transform_5(%arg0: i32) -> (i32, i32) {
    %c0_i32 = arith.constant 0 : i32
    %c0_i32_0 = arith.constant 0 : i32
    %c0_i32_1 = arith.constant 0 : i32
    return %c0_i32, %c0_i32_0 : i32, i32
  }
  func.func @transform_6(%arg0: i32) -> (i32, i32) {
    %c0_i32 = arith.constant 0 : i32
    %c0_i32_0 = arith.constant 0 : i32
    %c0_i32_1 = arith.constant 0 : i32
    return %c0_i32, %c0_i32_0 : i32, i32
  }
  func.func @transform_7(%arg0: i32) -> (i32, i32, i32) {
    %c0_i32 = arith.constant 0 : i32
    %c0_i32_0 = arith.constant 0 : i32
    %c0_i32_1 = arith.constant 0 : i32
    return %arg0, %c0_i32, %c0_i32_0 : i32, i32, i32
  }
}

</mosaic_0001>

<llo_original>
// kernel: tpu_custom_call.1
$region0: #{tpu_custom_call.1}
  #allocation0 [shape = 'u32[]', space=smem, size = 0x4, offset = 0x4, fixed_abs, tag = 'smem constant byte address 0x4 - core index']
  #allocation1 [shape = 'u32[144,128]{1,0:T(1,128)}', space=vmem, size = 0x12000, scoped, tag = 'internal scratch']
  %s0 = inlined_call_operand.vmem [shape: bf16[2,256,144], index: 0, kind: input, shape index: {}]
  %s1 = inlined_call_operand.vmem [shape: bf16[144,128], index: 1, kind: input, shape index: {}]
  %s2 = inlined_call_operand.vmem [shape: f32[1,128], index: 2, kind: input, shape index: {}]
  %s3 = inlined_call_operand.vmem [shape: f32[8,128], index: 3, kind: input, shape index: {}]
  %s4 = inlined_call_operand.vmem [shape: f32[8,1], index: 4, kind: input, shape index: {}]
  %s5 = inlined_call_operand.vmem [shape: f32[8,128], index: 5, kind: input, shape index: {}]
  %s6 = inlined_call_operand.vmem [shape: f32[1,128], index: 6, kind: input, shape index: {}]
  %s7 = inlined_call_operand.hbm [shape: f32[2,256,128], index: 7, kind: output, shape index: {}]
  %s8 = sld [smem:[#allocation0]]
  $region61: #{tpu_custom_call.1} parent=0
    _
  %s10 = ssub.s32 1, %s8
  %s11 = scalar_select 0, %s10, %s8
  $region1: #{tpu_custom_call.1} parent=0
    #allocation2 [shape = 'u8[262144]{0}', space=vmem, size = 0x40000, scoped, tag = 'output window, operand 0']
    #allocation3 [shape = 's32[2]{0}', space=sflag, size = 0x8, scoped, tag = 'scoped memory for tpu_custom_call.1']
    %12 = vsyncpa [#allocation3], 0
    %s13 = scalar_lea.sflag [#allocation3], 1
    %14 = vsyncpa %s13, 0
    loop: start=0, step=1, limit=4
    $region2: #{tpu_custom_call.1} parent=1 // loop_pre_header
      _
    $region3: #{tpu_custom_call.1} parent=1 // loop_header
      %s16 = sphi 0, %s20
      %p17 = scmp.ge.s32.totalorder %s16, 4
      %s26 = sphi 0, %s28
      %s29 = sphi 0, %s26
      %s30 = sphi 0, %s29
      %s46 = sphi 0, %s30
      %s50 = sphi 0, %s50
      %s52 = sphi 0, %s50
      %s53 = sphi 0, %s52
      %s67 = sphi 0, %s53
      %s71 = sphi 0, %s71
      %s73 = sphi 0, %s71
      %s74 = sphi 0, %s73
      %s88 = sphi 0, %s74
      %s92 = sphi 0, %s92
      %s94 = sphi 0, %s92
      %s95 = sphi 0, %s94
      %s109 = sphi 0, %s95
      %s113 = sphi 0, %s113
      %s115 = sphi 0, %s113
      %s116 = sphi 0, %s115
      %s130 = sphi 0, %s116
      %s134 = sphi 0, %s134
      %s136 = sphi 0, %s134
      %s137 = sphi 0, %s136
      %s151 = sphi 0, %s137
      %s155 = sphi 0, %s155
      %s157 = sphi 0, %s155
      %s158 = sphi 0, %s157
      %s172 = sphi 0, %s158
      %s178 = sphi 0, %s180
      %s181 = sphi 0, %s178
      %s182 = sphi 0, %s181
      %s198 = sphi 0, %s182
    $region4: #{tpu_custom_call.1} parent=1 // loop_header_branch
      %19 = sbr.rel (%p17) target = $region8
    $region5: #{tpu_custom_call.1} parent=1 // loop_body
      %s21 = ssub.s32 %s16, 1
      %s22 = ssub.s32 %s16, 2
      %s23 = sadd.s32 %s16, 1
      %s24 = ssub.s32 %s16, %s23
      %p25 = scmp.eq.s32.totalorder %s24, 0
      %s27 = sadd.s32 %s26, 1
      %s28 = scalar_select %p25, %s26, %s27
      %p31 = pneg %p25
      %p32 = scmp.eq.s32.totalorder %s16, 1
      %p33 = por %p31, %p32
      %p34 = scmp.ne.s32.totalorder %s26, %s29
      %p35 = scmp.eq.s32.totalorder %s16, 0
      %p36 = por %p34, %p35
      %p37 = scmp.ne.s32.totalorder %s26, %s29
      %p38 = scmp.eq.s32.totalorder %s21, 1
      %p39 = por %p37, %p38
      %p40 = scmp.ne.s32.totalorder %s29, %s30
      %p41 = scmp.eq.s32.totalorder %s21, 0
      %p42 = por %p40, %p41
      %p43 = scmp.ne.s32.totalorder %s29, %s30
      %p44 = scmp.eq.s32.totalorder %s22, 1
      %p45 = por %p43, %p44
      %p47 = scmp.ne.s32.totalorder %s30, %s46
      %p48 = scmp.eq.s32.totalorder %s22, 0
      %p49 = por %p47, %p48
      %s51 = sadd.s32 %s50, 1
      %p54 = scmp.eq.s32.totalorder %s16, 1
      %p55 = scmp.ne.s32.totalorder %s50, %s52
      %p56 = scmp.eq.s32.totalorder %s16, 0
      %p57 = por %p55, %p56
      %p58 = scmp.ne.s32.totalorder %s50, %s52
      %p59 = scmp.eq.s32.totalorder %s21, 1
      %p60 = por %p58, %p59
      %p61 = scmp.ne.s32.totalorder %s52, %s53
      %p62 = scmp.eq.s32.totalorder %s21, 0
      %p63 = por %p61, %p62
      %p64 = scmp.ne.s32.totalorder %s52, %s53
      %p65 = scmp.eq.s32.totalorder %s22, 1
      %p66 = por %p64, %p65
      %p68 = scmp.ne.s32.totalorder %s53, %s67
      %p69 = scmp.eq.s32.totalorder %s22, 0
      %p70 = por %p68, %p69
      %s72 = sadd.s32 %s71, 1
      %p75 = scmp.eq.s32.totalorder %s16, 1
      %p76 = scmp.ne.s32.totalorder %s71, %s73
      %p77 = scmp.eq.s32.totalorder %s16, 0
      %p78 = por %p76, %p77
      %p79 = scmp.ne.s32.totalorder %s71, %s73
      %p80 = scmp.eq.s32.totalorder %s21, 1
      %p81 = por %p79, %p80
      %p82 = scmp.ne.s32.totalorder %s73, %s74
      %p83 = scmp.eq.s32.totalorder %s21, 0
      %p84 = por %p82, %p83
      %p85 = scmp.ne.s32.totalorder %s73, %s74
      %p86 = scmp.eq.s32.totalorder %s22, 1
      %p87 = por %p85, %p86
      %p89 = scmp.ne.s32.totalorder %s74, %s88
      %p90 = scmp.eq.s32.totalorder %s22, 0
      %p91 = por %p89, %p90
      %s93 = sadd.s32 %s92, 1
      %p96 = scmp.eq.s32.totalorder %s16, 1
      %p97 = scmp.ne.s32.totalorder %s92, %s94
      %p98 = scmp.eq.s32.totalorder %s16, 0
      %p99 = por %p97, %p98
      %p100 = scmp.ne.s32.totalorder %s92, %s94
      %p101 = scmp.eq.s32.totalorder %s21, 1
      %p102 = por %p100, %p101
      %p103 = scmp.ne.s32.totalorder %s94, %s95
      %p104 = scmp.eq.s32.totalorder %s21, 0
      %p105 = por %p103, %p104
      %p106 = scmp.ne.s32.totalorder %s94, %s95
      %p107 = scmp.eq.s32.totalorder %s22, 1
      %p108 = por %p106, %p107
      %p110 = scmp.ne.s32.totalorder %s95, %s109
      %p111 = scmp.eq.s32.totalorder %s22, 0
      %p112 = por %p110, %p111
      %s114 = sadd.s32 %s113, 1
      %p117 = scmp.eq.s32.totalorder %s16, 1
      %p118 = scmp.ne.s32.totalorder %s113, %s115
      %p119 = scmp.eq.s32.totalorder %s16, 0
      %p120 = por %p118, %p119
      %p121 = scmp.ne.s32.totalorder %s113, %s115
      %p122 = scmp.eq.s32.totalorder %s21, 1
      %p123 = por %p121, %p122
      %p124 = scmp.ne.s32.totalorder %s115, %s116
      %p125 = scmp.eq.s32.totalorder %s21, 0
      %p126 = por %p124, %p125
      %p127 = scmp.ne.s32.totalorder %s115, %s116
      %p128 = scmp.eq.s32.totalorder %s22, 1
      %p129 = por %p127, %p128
      %p131 = scmp.ne.s32.totalorder %s116, %s130
      %p132 = scmp.eq.s32.totalorder %s22, 0
      %p133 = por %p131, %p132
      %s135 = sadd.s32 %s134, 1
      %p138 = scmp.eq.s32.totalorder %s16, 1
      %p139 = scmp.ne.s32.totalorder %s134, %s136
      %p140 = scmp.eq.s32.totalorder %s16, 0
      %p141 = por %p139, %p140
      %p142 = scmp.ne.s32.totalorder %s134, %s136
      %p143 = scmp.eq.s32.totalorder %s21, 1
      %p144 = por %p142, %p143
      %p145 = scmp.ne.s32.totalorder %s136, %s137
      %p146 = scmp.eq.s32.totalorder %s21, 0
      %p147 = por %p145, %p146
      %p148 = scmp.ne.s32.totalorder %s136, %s137
      %p149 = scmp.eq.s32.totalorder %s22, 1
      %p150 = por %p148, %p149
      %p152 = scmp.ne.s32.totalorder %s137, %s151
      %p153 = scmp.eq.s32.totalorder %s22, 0
      %p154 = por %p152, %p153
      %s156 = sadd.s32 %s155, 1
      %p159 = scmp.eq.s32.totalorder %s16, 1
      %p160 = scmp.ne.s32.totalorder %s155, %s157
      %p161 = scmp.eq.s32.totalorder %s16, 0
      %p162 = por %p160, %p161
      %p163 = scmp.ne.s32.totalorder %s155, %s157
      %p164 = scmp.eq.s32.totalorder %s21, 1
      %p165 = por %p163, %p164
      %p166 = scmp.ne.s32.totalorder %s157, %s158
      %p167 = scmp.eq.s32.totalorder %s21, 0
      %p168 = por %p166, %p167
      %p169 = scmp.ne.s32.totalorder %s157, %s158
      %p170 = scmp.eq.s32.totalorder %s22, 1
      %p171 = por %p169, %p170
      %p173 = scmp.ne.s32.totalorder %s158, %s172
      %p174 = scmp.eq.s32.totalorder %s22, 0
      %p175 = por %p173, %p174
      %s176 = ssub.s32 %s16, %s23
      %p177 = scmp.eq.s32.totalorder %s176, 0
      %s179 = sadd.s32 %s178, 1
      %s180 = scalar_select %p177, %s178, %s179
      %p183 = pneg %p177
      %p184 = scmp.eq.s32.totalorder %s16, 1
      %p185 = por %p183, %p184
      %p186 = scmp.ne.s32.totalorder %s178, %s181
      %p187 = scmp.eq.s32.totalorder %s16, 0
      %p188 = por %p186, %p187
      %p189 = scmp.ne.s32.totalorder %s178, %s181
      %p190 = scmp.eq.s32.totalorder %s21, 1
      %p191 = por %p189, %p190
      %p192 = scmp.ne.s32.totalorder %s181, %s182
      %p193 = scmp.eq.s32.totalorder %s21, 0
      %p194 = por %p192, %p193
      %p195 = scmp.ne.s32.totalorder %s181, %s182
      %p196 = scmp.eq.s32.totalorder %s22, 1
      %p197 = por %p195, %p196
      %p199 = scmp.ne.s32.totalorder %s182, %s198
      %p200 = scmp.eq.s32.totalorder %s22, 0
      %p201 = por %p199, %p200
      %p202 = scmp.le.s32.totalorder 1, %s16
      %p203 = scmp.lt.s32.totalorder %s16, 3
      %p204 = pnand %p202, %p203
      %p205 = pneg %p204
      // Predicated region
      $region9: #{tpu_custom_call.1} parent=5 // pred_check
        _
      $region10: #{tpu_custom_call.1} parent=5 // pred_check_branch
        %207 = sbr.rel (%p204) target = $region12
      $region11: #{tpu_custom_call.1} parent=5 // pred_region
        %s208 = ssub.s32 %s16, 1
        // Predicated region
        $region13: #{tpu_custom_call.1} parent=11 // pred_check
          %p209 = pneg %p63
        $region14: #{tpu_custom_call.1} parent=11 // pred_check_branch
          %211 = sbr.rel (%p209) target = $region16
        $region15: #{tpu_custom_call.1} parent=11 // pred_region
          _
        $region16: #{tpu_custom_call.1} parent=11 // pred_fallthru
          _
        // Predicated region
        $region17: #{tpu_custom_call.1} parent=11 // pred_check
          %p212 = pneg %p84
        $region18: #{tpu_custom_call.1} parent=11 // pred_check_branch
          %214 = sbr.rel (%p212) target = $region20
        $region19: #{tpu_custom_call.1} parent=11 // pred_region
          _
        $region20: #{tpu_custom_call.1} parent=11 // pred_fallthru
          _
        // Predicated region
        $region21: #{tpu_custom_call.1} parent=11 // pred_check
          %p215 = pneg %p105
        $region22: #{tpu_custom_call.1} parent=11 // pred_check_branch
          %217 = sbr.rel (%p215) target = $region24
        $region23: #{tpu_custom_call.1} parent=11 // pred_region
          _
        $region24: #{tpu_custom_call.1} parent=11 // pred_fallthru
          _
        // Predicated region
        $region25: #{tpu_custom_call.1} parent=11 // pred_check
          %p218 = pneg %p126
        $region26: #{tpu_custom_call.1} parent=11 // pred_check_branch
          %220 = sbr.rel (%p218) target = $region28
        $region27: #{tpu_custom_call.1} parent=11 // pred_region
          _
        $region28: #{tpu_custom_call.1} parent=11 // pred_fallthru
          _
        // Predicated region
        $region29: #{tpu_custom_call.1} parent=11 // pred_check
          %p221 = pneg %p147
        $region30: #{tpu_custom_call.1} parent=11 // pred_check_branch
          %223 = sbr.rel (%p221) target = $region32
        $region31: #{tpu_custom_call.1} parent=11 // pred_region
          _
        $region32: #{tpu_custom_call.1} parent=11 // pred_fallthru
          _
        // Predicated region
        $region33: #{tpu_custom_call.1} parent=11 // pred_check
          %p224 = pneg %p168
        $region34: #{tpu_custom_call.1} parent=11 // pred_check_branch
          %226 = sbr.rel (%p224) target = $region36
        $region35: #{tpu_custom_call.1} parent=11 // pred_region
          _
        $region36: #{tpu_custom_call.1} parent=11 // pred_fallthru
          _
      $region12: #{tpu_custom_call.1} parent=5 // pred_fallthru
        _
      %p227 = scmp.lt.s32.totalorder %s16, 2
      // Predicated region
      $region37: #{tpu_custom_call.1} parent=5 // pred_check
        %p228 = pneg %p227
      $region38: #{tpu_custom_call.1} parent=5 // pred_check_branch
        %230 = sbr.rel (%p228) target = $region40
      $region39: #{tpu_custom_call.1} parent=5 // pred_region
        // Predicated region
        $region41: #{tpu_custom_call.1} parent=39 // pred_check
          %p231 = pneg %p36
        $region42: #{tpu_custom_call.1} parent=39 // pred_check_branch
          %233 = sbr.rel (%p231) target = $region44
        $region43: #{tpu_custom_call.1} parent=39 // pred_region
          %p234 = scmp.lt.s32.totalorder %s16, 1
          %s235 = scalar_select %p234, %s16, 1
          %s236 = smul.addr %s235, 64
          %s237 = smul.addr %s236, 4
          %s238 = scalar_lea.vmem %s0, %s237
        $region44: #{tpu_custom_call.1} parent=39 // pred_fallthru
          _
      $region40: #{tpu_custom_call.1} parent=5 // pred_fallthru
        _
      %p239 = scmp.le.s32.totalorder 1, %s16
      %p240 = scmp.lt.s32.totalorder %s16, 3
      %p241 = pnand %p239, %p240
      %p242 = pneg %p241
      // Predicated region
      $region45: #{tpu_custom_call.1} parent=5 // pred_check
        _
      $region46: #{tpu_custom_call.1} parent=5 // pred_check_branch
        %244 = sbr.rel (%p241) target = $region48
      $region47: #{tpu_custom_call.1} parent=5 // pred_region
        %s245 = ssub.s32 %s16, 1
        %p246 = scmp.lt.s32.totalorder %s21, 1
        %s247 = scalar_select %p246, %s21, 1
        %s248 = smul.addr %s247, 64
        %s249 = smul.addr %s248, 4
        %s250 = scalar_lea.vmem %s0, %s249
        %p251 = pneg %p42
        %p252 = pneg %p39
        %p253 = pneg %p63
        %p254 = pneg %p60
        %p255 = pneg %p84
        %p256 = pneg %p81
        %p257 = pneg %p105
        %p258 = pneg %p102
        %p259 = pneg %p126
        %p260 = pneg %p123
        %p261 = pneg %p147
        %p262 = pneg %p144
        %p263 = pneg %p168
        %p264 = pneg %p165
        %p265 = pneg %p194
        %p266 = pneg %p191
        %s267 = sand.u32 %s181, 1
        %s268 = scalar_lea.sflag [#allocation3], %s267
        %s269 = sand.u32 %s181, 1
        %s270 = smul.addr %s269, 256
        %s271 = scalar_lea.vmem [#allocation2], %s270
        %p272 = scmp.lt.s32.totalorder %s21, 1
        %s273 = scalar_select %p272, %s21, 1
        %s274 = smul.addr %s273, 64
        %s275 = smul.addr %s274, 4
        %s276 = scalar_lea.vmem %s0, %s275
        %v278 = vld [vmem:[%s276] sm:$0xff]
        %v279 = vld [vmem:[%s276 + $0x8] sm:$0xff]
        %v280 = vld [vmem:[%s276 + $0x10] sm:$0xff]
        %v281 = vld [vmem:[%s276 + $0x18] sm:$0xff]
        %v282 = vld [vmem:[%s276 + $0x20] sm:$0xff]
        %v283 = vld [vmem:[%s276 + $0x28] sm:$0xff]
        %v284 = vld [vmem:[%s276 + $0x30] sm:$0xff]
        %v285 = vld [vmem:[%s276 + $0x38] sm:$0xff]
        %v286 = vld [vmem:[%s276 + $0x40] sm:$0xff]
        %v287 = vld [vmem:[%s276 + $0x48] sm:$0xff]
        %v288 = vld [vmem:[%s276 + $0x50] sm:$0xff]
        %v289 = vld [vmem:[%s276 + $0x58] sm:$0xff]
        %v290 = vld [vmem:[%s276 + $0x60] sm:$0xff]
        %v291 = vld [vmem:[%s276 + $0x68] sm:$0xff]
        %v292 = vld [vmem:[%s276 + $0x70] sm:$0xff]
        %v293 = vld [vmem:[%s276 + $0x78] sm:$0xff]
        %v294 = vld [vmem:[%s276 + $0x80] sm:$0xff]
        %v295 = vld [vmem:[%s276 + $0x88] sm:$0xff]
        %v296 = vld [vmem:[%s276 + $0x90] sm:$0xff]
        %v297 = vld [vmem:[%s276 + $0x98] sm:$0xff]
        %v298 = vld [vmem:[%s276 + $0xa0] sm:$0xff]
        %v299 = vld [vmem:[%s276 + $0xa8] sm:$0xff]
        %v300 = vld [vmem:[%s276 + $0xb0] sm:$0xff]
        %v301 = vld [vmem:[%s276 + $0xb8] sm:$0xff]
        %v302 = vld [vmem:[%s276 + $0xc0] sm:$0xff]
        %v303 = vld [vmem:[%s276 + $0xc8] sm:$0xff]
        %v304 = vld [vmem:[%s276 + $0xd0] sm:$0xff]
        %v305 = vld [vmem:[%s276 + $0xd8] sm:$0xff]
        %v306 = vld [vmem:[%s276 + $0xe0] sm:$0xff]
        %v307 = vld [vmem:[%s276 + $0xe8] sm:$0xff]
        %v308 = vld [vmem:[%s276 + $0xf0] sm:$0xff]
        %v309 = vld [vmem:[%s276 + $0xf8] sm:$0xff]
        %v310 = vld [vmem:[%s1] sm:$0xf]
        %v311 = vld [vmem:[%s1 + $0x4] sm:$0xf]
        %v312 = vld [vmem:[%s1 + $0x8] sm:$0xf]
        %v313 = vld [vmem:[%s1 + $0xc] sm:$0xf]
        %v314 = vld [vmem:[%s1 + $0x10] sm:$0xf]
        %v315 = vld [vmem:[%s1 + $0x14] sm:$0xf]
        %v316 = vld [vmem:[%s1 + $0x18] sm:$0xf]
        %v317 = vld [vmem:[%s1 + $0x1c] sm:$0xf]
        %v318 = vld [vmem:[%s1 + $0x20] sm:$0xf]
        %v319 = vld [vmem:[%s1 + $0x24] sm:$0xf]
        %v320 = vld [vmem:[%s1 + $0x28] sm:$0xf]
        %v321 = vld [vmem:[%s1 + $0x2c] sm:$0xf]
        %v322 = vld [vmem:[%s1 + $0x30] sm:$0xf]
        %v323 = vld [vmem:[%s1 + $0x34] sm:$0xf]
        %v324 = vld [vmem:[%s1 + $0x38] sm:$0xf]
        %v325 = vld [vmem:[%s1 + $0x3c] sm:$0xf]
        %v326 = vld [vmem:[%s1 + $0x40] sm:$0xf]
        %v327 = vld [vmem:[%s1 + $0x44] sm:$0xf]
        %v328 = vld [vmem:[%s2] sm:$0x1]
        %v330 = vlaneseq
        %v331 = vshrl.u32 %v330, 7
        %v332 = vsub.s32 0, %v331
        %v333 = vrot.slane %v328, %v332
        %v367 = vunpack.c.l.b16 %v278
        %v368 = vunpack.c.h.b16 %v278
        %v369 = vunpack.c.l.b16 %v279
        %v370 = vunpack.c.h.b16 %v279
        %v371 = vunpack.c.l.b16 %v280
        %v372 = vunpack.c.h.b16 %v280
        %v373 = vunpack.c.l.b16 %v281
        %v374 = vunpack.c.h.b16 %v281
        %v375 = vunpack.c.l.b16 %v282
        %v376 = vunpack.c.h.b16 %v282
        %v377 = vunpack.c.l.b16 %v283
        %v378 = vunpack.c.h.b16 %v283
        %v379 = vunpack.c.l.b16 %v284
        %v380 = vunpack.c.h.b16 %v284
        %v381 = vunpack.c.l.b16 %v285
        %v382 = vunpack.c.h.b16 %v285
        %v383 = vunpack.c.l.b16 %v286
        %v384 = vunpack.c.h.b16 %v286
        %v385 = vunpack.c.l.b16 %v287
        %v386 = vunpack.c.h.b16 %v287
        %v387 = vunpack.c.l.b16 %v288
        %v388 = vunpack.c.h.b16 %v288
        %v389 = vunpack.c.l.b16 %v289
        %v390 = vunpack.c.h.b16 %v289
        %v391 = vunpack.c.l.b16 %v290
        %v392 = vunpack.c.h.b16 %v290
        %v393 = vunpack.c.l.b16 %v291
        %v394 = vunpack.c.h.b16 %v291
        %v395 = vunpack.c.l.b16 %v292
        %v396 = vunpack.c.h.b16 %v292
        %v397 = vunpack.c.l.b16 %v293
        %v398 = vunpack.c.h.b16 %v293
        %v399 = vunpack.c.l.b16 %v294
        %v400 = vunpack.c.h.b16 %v294
        %v401 = vunpack.c.l.b16 %v295
        %v402 = vunpack.c.h.b16 %v295
        %v403 = vunpack.c.l.b16 %v296
        %v404 = vunpack.c.h.b16 %v296
        %v405 = vunpack.c.l.b16 %v297
        %v406 = vunpack.c.h.b16 %v297
        %v407 = vunpack.c.l.b16 %v298
        %v408 = vunpack.c.h.b16 %v298
        %v409 = vunpack.c.l.b16 %v299
        %v410 = vunpack.c.h.b16 %v299
        %v411 = vunpack.c.l.b16 %v300
        %v412 = vunpack.c.h.b16 %v300
        %v413 = vunpack.c.l.b16 %v301
        %v414 = vunpack.c.h.b16 %v301
        %v415 = vunpack.c.l.b16 %v302
        %v416 = vunpack.c.h.b16 %v302
        %v417 = vunpack.c.l.b16 %v303
        %v418 = vunpack.c.h.b16 %v303
        %v419 = vunpack.c.l.b16 %v304
        %v420 = vunpack.c.h.b16 %v304
        %v421 = vunpack.c.l.b16 %v305
        %v422 = vunpack.c.h.b16 %v305
        %v423 = vunpack.c.l.b16 %v306
        %v424 = vunpack.c.h.b16 %v306
        %v425 = vunpack.c.l.b16 %v307
        %v426 = vunpack.c.h.b16 %v307
        %v427 = vunpack.c.l.b16 %v308
        %v428 = vunpack.c.h.b16 %v308
        %v429 = vunpack.c.l.b16 %v309
        %v430 = vunpack.c.h.b16 %v309
        %v431 = vpack.c.b16 %v369, %v367
        %v432 = vpack.c.b16 %v370, %v368
        %v433 = vpack.c.b16 %v373, %v371
        %v434 = vpack.c.b16 %v374, %v372
        %v435 = vpack.c.b16 %v377, %v375
        %v436 = vpack.c.b16 %v378, %v376
        %v437 = vpack.c.b16 %v381, %v379
        %v438 = vpack.c.b16 %v382, %v380
        %v439 = vpack.c.b16 %v385, %v383
        %v440 = vpack.c.b16 %v386, %v384
        %v441 = vpack.c.b16 %v389, %v387
        %v442 = vpack.c.b16 %v390, %v388
        %v443 = vpack.c.b16 %v393, %v391
        %v444 = vpack.c.b16 %v394, %v392
        %v445 = vpack.c.b16 %v397, %v395
        %v446 = vpack.c.b16 %v398, %v396
        %v447 = vpack.c.b16 %v401, %v399
        %v448 = vpack.c.b16 %v402, %v400
        %v449 = vpack.c.b16 %v405, %v403
        %v450 = vpack.c.b16 %v406, %v404
        %v451 = vpack.c.b16 %v409, %v407
        %v452 = vpack.c.b16 %v410, %v408
        %v453 = vpack.c.b16 %v413, %v411
        %v454 = vpack.c.b16 %v414, %v412
        %v455 = vpack.c.b16 %v417, %v415
        %v456 = vpack.c.b16 %v418, %v416
        %v457 = vpack.c.b16 %v421, %v419
        %v458 = vpack.c.b16 %v422, %v420
        %v459 = vpack.c.b16 %v425, %v423
        %v460 = vpack.c.b16 %v426, %v424
        %v461 = vpack.c.b16 %v429, %v427
        %v462 = vpack.c.b16 %v430, %v428
        %v497 = vunpack.c.l.b16 %v310
        %v498 = vunpack.c.l.b16 %v311
        %v499 = vunpack.c.l.b16 %v312
        %v500 = vunpack.c.l.b16 %v313
        %v501 = vunpack.c.l.b16 %v314
        %v502 = vunpack.c.l.b16 %v315
        %v503 = vunpack.c.l.b16 %v316
        %v504 = vunpack.c.l.b16 %v317
        %v505 = vunpack.c.l.b16 %v318
        %v506 = vunpack.c.l.b16 %v319
        %v507 = vunpack.c.l.b16 %v320
        %v508 = vunpack.c.l.b16 %v321
        %v509 = vunpack.c.l.b16 %v322
        %v510 = vunpack.c.l.b16 %v323
        %v511 = vunpack.c.l.b16 %v324
        %v512 = vunpack.c.l.b16 %v325
        %v513 = vunpack.c.l.b16 %v326
        %v514 = vunpack.c.l.b16 %v327
        %v515 = vpack.c.b16 %v498, %v497
        %v516 = vpack.c.b16 %v500, %v499
        %v517 = vpack.c.b16 %v502, %v501
        %v518 = vpack.c.b16 %v504, %v503
        %v519 = vpack.c.b16 %v506, %v505
        %v520 = vpack.c.b16 %v508, %v507
        %v521 = vpack.c.b16 %v510, %v509
        %v522 = vpack.c.b16 %v512, %v511
        %v523 = vpack.c.b16 %v514, %v513
        %vm533 = vcmask 130048
        %v535 = vsel %vm533, %v432, 0
        %v538 = vsel %vm533, %v434, 0
        %v541 = vsel %vm533, %v436, 0
        %v544 = vsel %vm533, %v438, 0
        %v547 = vsel %vm533, %v440, 0
        %v550 = vsel %vm533, %v442, 0
        %v553 = vsel %vm533, %v444, 0
        %v556 = vsel %vm533, %v446, 0
        %v559 = vsel %vm533, %v448, 0
        %v562 = vsel %vm533, %v450, 0
        %v565 = vsel %vm533, %v452, 0
        %v568 = vsel %vm533, %v454, 0
        %v571 = vsel %vm533, %v456, 0
        %v574 = vsel %vm533, %v458, 0
        %v577 = vsel %vm533, %v460, 0
        %v580 = vsel %vm533, %v462, 0
        %582 = vmatprep.subr.bf16.mxu0 0
        %583 = vmatpush1.bf16.msra.mxu0 %v515
        %584 = vmatprep.subr.bf16.mxu0 0
        %585 = vmatpush1.bf16.msra.mxu0 %v516
        %586 = vmatprep.subr.bf16.mxu0 0
        %587 = vmatpush1.bf16.msra.mxu0 %v517
        %588 = vmatprep.subr.bf16.mxu0 0
        %589 = vmatpush1.bf16.msra.mxu0 %v518
        %590 = vmatprep.subr.bf16.mxu0 0
        %591 = vmatpush1.bf16.msra.mxu0 %v519
        %592 = vmatprep.subr.bf16.mxu0 0
        %593 = vmatpush1.bf16.msra.mxu0 %v520
        %594 = vmatprep.subr.bf16.mxu0 0
        %595 = vmatpush1.bf16.msra.mxu0 %v521
        %596 = vmatprep.subr.bf16.mxu0 0
        %597 = vmatpush1.bf16.msra.mxu0 %v522
        %598 = vmatprep.subr.bf16.mxu0 0
        %599 = vmatpush1.bf16.msra.mxu0 %v523
        %600 = vmatprep.subr.bf16.mxu0 0
        %601 = vmatpush1.bf16.msra.mxu0 0
        %602 = vmatprep.subr.bf16.mxu0 0
        %603 = vmatpush1.bf16.msra.mxu0 0
        %604 = vmatprep.subr.bf16.mxu0 0
        %605 = vmatpush1.bf16.msra.mxu0 0
        %606 = vmatprep.subr.bf16.mxu0 0
        %607 = vmatpush1.bf16.msra.mxu0 0
        %608 = vmatprep.subr.bf16.mxu0 0
        %609 = vmatpush1.bf16.msra.mxu0 0
        %610 = vmatprep.subr.bf16.mxu0 0
        %611 = vmatpush1.bf16.msra.mxu0 0
        %612 = vmatprep.subr.bf16.mxu0 0
        %613 = vmatpush1.bf16.msra.mxu0 0
        %614 = vmatprep.mubr.bf16.mxu0 %v535
        %615 = vmatmul.mubr.bf16.gmra.mrb[0].mxu0 %v431
        %v616 = vpop.f32.mrb[0].mxu0
        %v617 = vadd.f32 %v333, %v616
        %v618 = vpop.f32.mrb[0].mxu0
        %v619 = vpop.f32.mrb[0].mxu0
        %v620 = vadd.f32 %v333, %v619
        %v621 = vpop.f32.mrb[0].mxu0
        %622 = vmatprep.mubr.bf16.mxu0 %v538
        %623 = vmatmul.mubr.bf16.gmra.mrb[0].mxu0 %v433
        %v624 = vpop.f32.mrb[0].mxu0
        %v625 = vadd.f32 %v333, %v624
        %v626 = vpop.f32.mrb[0].mxu0
        %v627 = vpop.f32.mrb[0].mxu0
        %v628 = vadd.f32 %v333, %v627
        %v629 = vpop.f32.mrb[0].mxu0
        %630 = vmatprep.mubr.bf16.mxu0 %v541
        %631 = vmatmul.mubr.bf16.gmra.mrb[0].mxu0 %v435
        %v632 = vpop.f32.mrb[0].mxu0
        %v633 = vadd.f32 %v333, %v632
        %v634 = vpop.f32.mrb[0].mxu0
        %v635 = vpop.f32.mrb[0].mxu0
        %v636 = vadd.f32 %v333, %v635
        %v637 = vpop.f32.mrb[0].mxu0
        %638 = vmatprep.mubr.bf16.mxu0 %v544
        %639 = vmatmul.mubr.bf16.gmra.mrb[0].mxu0 %v437
        %v640 = vpop.f32.mrb[0].mxu0
        %v641 = vadd.f32 %v333, %v640
        %v642 = vpop.f32.mrb[0].mxu0
        %v643 = vpop.f32.mrb[0].mxu0
        %v644 = vadd.f32 %v333, %v643
        %v645 = vpop.f32.mrb[0].mxu0
        %646 = vmatprep.mubr.bf16.mxu0 %v547
        %647 = vmatmul.mubr.bf16.gmra.mrb[0].mxu0 %v439
        %v648 = vpop.f32.mrb[0].mxu0
        %v649 = vadd.f32 %v333, %v648
        %v650 = vpop.f32.mrb[0].mxu0
        %v651 = vpop.f32.mrb[0].mxu0
        %v652 = vadd.f32 %v333, %v651
        %v653 = vpop.f32.mrb[0].mxu0
        %654 = vmatprep.mubr.bf16.mxu0 %v550
        %655 = vmatmul.mubr.bf16.gmra.mrb[0].mxu0 %v441
        %v656 = vpop.f32.mrb[0].mxu0
        %v657 = vadd.f32 %v333, %v656
        %v658 = vpop.f32.mrb[0].mxu0
        %v659 = vpop.f32.mrb[0].mxu0
        %v660 = vadd.f32 %v333, %v659
        %v661 = vpop.f32.mrb[0].mxu0
        %662 = vmatprep.mubr.bf16.mxu0 %v553
        %663 = vmatmul.mubr.bf16.gmra.mrb[0].mxu0 %v443
        %v664 = vpop.f32.mrb[0].mxu0
        %v665 = vadd.f32 %v333, %v664
        %v666 = vpop.f32.mrb[0].mxu0
        %v667 = vpop.f32.mrb[0].mxu0
        %v668 = vadd.f32 %v333, %v667
        %v669 = vpop.f32.mrb[0].mxu0
        %670 = vmatprep.mubr.bf16.mxu0 %v556
        %671 = vmatmul.mubr.bf16.gmra.mrb[0].mxu0 %v445
        %v672 = vpop.f32.mrb[0].mxu0
        %v673 = vadd.f32 %v333, %v672
        %v674 = vpop.f32.mrb[0].mxu0
        %v675 = vpop.f32.mrb[0].mxu0
        %v676 = vadd.f32 %v333, %v675
        %v677 = vpop.f32.mrb[0].mxu0
        %678 = vmatprep.mubr.bf16.mxu0 %v559
        %679 = vmatmul.mubr.bf16.gmra.mrb[0].mxu0 %v447
        %v680 = vpop.f32.mrb[0].mxu0
        %v681 = vadd.f32 %v333, %v680
        %v682 = vpop.f32.mrb[0].mxu0
        %v683 = vpop.f32.mrb[0].mxu0
        %v684 = vadd.f32 %v333, %v683
        %v685 = vpop.f32.mrb[0].mxu0
        %686 = vmatprep.mubr.bf16.mxu0 %v562
        %687 = vmatmul.mubr.bf16.gmra.mrb[0].mxu0 %v449
        %v688 = vpop.f32.mrb[0].mxu0
        %v689 = vadd.f32 %v333, %v688
        %v690 = vpop.f32.mrb[0].mxu0
        %v691 = vpop.f32.mrb[0].mxu0
        %v692 = vadd.f32 %v333, %v691
        %v693 = vpop.f32.mrb[0].mxu0
        %694 = vmatprep.mubr.bf16.mxu0 %v565
        %695 = vmatmul.mubr.bf16.gmra.mrb[0].mxu0 %v451
        %v696 = vpop.f32.mrb[0].mxu0
        %v697 = vadd.f32 %v333, %v696
        %v698 = vpop.f32.mrb[0].mxu0
        %v699 = vpop.f32.mrb[0].mxu0
        %v700 = vadd.f32 %v333, %v699
        %v701 = vpop.f32.mrb[0].mxu0
        %702 = vmatprep.mubr.bf16.mxu0 %v568
        %703 = vmatmul.mubr.bf16.gmra.mrb[0].mxu0 %v453
        %v704 = vpop.f32.mrb[0].mxu0
        %v705 = vadd.f32 %v333, %v704
        %v706 = vpop.f32.mrb[0].mxu0
        %v707 = vpop.f32.mrb[0].mxu0
        %v708 = vadd.f32 %v333, %v707
        %v709 = vpop.f32.mrb[0].mxu0
        %710 = vmatprep.mubr.bf16.mxu0 %v571
        %711 = vmatmul.mubr.bf16.gmra.mrb[0].mxu0 %v455
        %v712 = vpop.f32.mrb[0].mxu0
        %v713 = vadd.f32 %v333, %v712
        %v714 = vpop.f32.mrb[0].mxu0
        %v715 = vpop.f32.mrb[0].mxu0
        %v716 = vadd.f32 %v333, %v715
        %v717 = vpop.f32.mrb[0].mxu0
        %718 = vmatprep.mubr.bf16.mxu0 %v574
        %719 = vmatmul.mubr.bf16.gmra.mrb[0].mxu0 %v457
        %v720 = vpop.f32.mrb[0].mxu0
        %v721 = vadd.f32 %v333, %v720
        %v722 = vpop.f32.mrb[0].mxu0
        %v723 = vpop.f32.mrb[0].mxu0
        %v724 = vadd.f32 %v333, %v723
        %v725 = vpop.f32.mrb[0].mxu0
        %726 = vmatprep.mubr.bf16.mxu0 %v577
        %727 = vmatmul.mubr.bf16.gmra.mrb[0].mxu0 %v459
        %v728 = vpop.f32.mrb[0].mxu0
        %v729 = vadd.f32 %v333, %v728
        %v730 = vpop.f32.mrb[0].mxu0
        %v731 = vpop.f32.mrb[0].mxu0
        %v732 = vadd.f32 %v333, %v731
        %v733 = vpop.f32.mrb[0].mxu0
        %734 = vmatprep.mubr.bf16.mxu0 %v580
        %735 = vmatmul.mubr.bf16.gmra.mrb[0].mxu0 %v461
        %v736 = vpop.f32.mrb[0].mxu0
        %v737 = vadd.f32 %v333, %v736
        %v738 = vpop.f32.mrb[0].mxu0
        %v739 = vpop.f32.mrb[0].mxu0
        %v740 = vadd.f32 %v333, %v739
        %v741 = vpop.f32.mrb[0].mxu0
        %742 = vdwg.mxu0
        %v743 = vxor.u32 %v617, 2147483648
        %v744 = vxor.u32 %v620, 2147483648
        %v745 = vxor.u32 %v625, 2147483648
        %v746 = vxor.u32 %v628, 2147483648
        %v747 = vxor.u32 %v633, 2147483648
        %v748 = vxor.u32 %v636, 2147483648
        %v749 = vxor.u32 %v641, 2147483648
        %v750 = vxor.u32 %v644, 2147483648
        %v751 = vxor.u32 %v649, 2147483648
        %v752 = vxor.u32 %v652, 2147483648
        %v753 = vxor.u32 %v657, 2147483648
        %v754 = vxor.u32 %v660, 2147483648
        %v755 = vxor.u32 %v665, 2147483648
        %v756 = vxor.u32 %v668, 2147483648
        %v757 = vxor.u32 %v673, 2147483648
        %v758 = vxor.u32 %v676, 2147483648
        %v759 = vxor.u32 %v681, 2147483648
        %v760 = vxor.u32 %v684, 2147483648
        %v761 = vxor.u32 %v689, 2147483648
        %v762 = vxor.u32 %v692, 2147483648
        %v763 = vxor.u32 %v697, 2147483648
        %v764 = vxor.u32 %v700, 2147483648
        %v765 = vxor.u32 %v705, 2147483648
        %v766 = vxor.u32 %v708, 2147483648
        %v767 = vxor.u32 %v713, 2147483648
        %v768 = vxor.u32 %v716, 2147483648
        %v769 = vxor.u32 %v721, 2147483648
        %v770 = vxor.u32 %v724, 2147483648
        %v771 = vxor.u32 %v729, 2147483648
        %v772 = vxor.u32 %v732, 2147483648
        %v773 = vxor.u32 %v737, 2147483648
        %v774 = vxor.u32 %v740, 2147483648
        %v775 = vmul.f32 %v743, 1.442695
        %v776 = vpow.pop %v775
        %v777 = vmul.f32 %v744, 1.442695
        %v778 = vpow.pop %v777
        %v779 = vmul.f32 %v745, 1.442695
        %v780 = vpow.pop %v779
        %v781 = vmul.f32 %v746, 1.442695
        %v782 = vpow.pop %v781
        %v783 = vmul.f32 %v747, 1.442695
        %v784 = vpow.pop %v783
        %v785 = vmul.f32 %v748, 1.442695
        %v786 = vpow.pop %v785
        %v787 = vmul.f32 %v749, 1.442695
        %v788 = vpow.pop %v787
        %v789 = vmul.f32 %v750, 1.442695
        %v790 = vpow.pop %v789
        %v791 = vmul.f32 %v751, 1.442695
        %v792 = vpow.pop %v791
        %v793 = vmul.f32 %v752, 1.442695
        %v794 = vpow.pop %v793
        %v795 = vmul.f32 %v753, 1.442695
        %v796 = vpow.pop %v795
        %v797 = vmul.f32 %v754, 1.442695
        %v798 = vpow.pop %v797
        %v799 = vmul.f32 %v755, 1.442695
        %v800 = vpow.pop %v799
        %v801 = vmul.f32 %v756, 1.442695
        %v802 = vpow.pop %v801
        %v803 = vmul.f32 %v757, 1.442695
        %v804 = vpow.pop %v803
        %v805 = vmul.f32 %v758, 1.442695
        %v806 = vpow.pop %v805
        %v807 = vmul.f32 %v759, 1.442695
        %v808 = vpow.pop %v807
        %v809 = vmul.f32 %v760, 1.442695
        %v810 = vpow.pop %v809
        %v811 = vmul.f32 %v761, 1.442695
        %v812 = vpow.pop %v811
        %v813 = vmul.f32 %v762, 1.442695
        %v814 = vpow.pop %v813
        %v815 = vmul.f32 %v763, 1.442695
        %v816 = vpow.pop %v815
        %v817 = vmul.f32 %v764, 1.442695
        %v818 = vpow.pop %v817
        %v819 = vmul.f32 %v765, 1.442695
        %v820 = vpow.pop %v819
        %v821 = vmul.f32 %v766, 1.442695
        %v822 = vpow.pop %v821
        %v823 = vmul.f32 %v767, 1.442695
        %v824 = vpow.pop %v823
        %v825 = vmul.f32 %v768, 1.442695
        %v826 = vpow.pop %v825
        %v827 = vmul.f32 %v769, 1.442695
        %v828 = vpow.pop %v827
        %v829 = vmul.f32 %v770, 1.442695
        %v830 = vpow.pop %v829
        %v831 = vmul.f32 %v771, 1.442695
        %v832 = vpow.pop %v831
        %v833 = vmul.f32 %v772, 1.442695
        %v834 = vpow.pop %v833
        %v835 = vmul.f32 %v773, 1.442695
        %v836 = vpow.pop %v835
        %v837 = vmul.f32 %v774, 1.442695
        %v838 = vpow.pop %v837
        %v839 = vadd.f32 %v776, 1.0
        %v840 = vadd.f32 %v778, 1.0
        %v841 = vadd.f32 %v780, 1.0
        %v842 = vadd.f32 %v782, 1.0
        %v843 = vadd.f32 %v784, 1.0
        %v844 = vadd.f32 %v786, 1.0
        %v845 = vadd.f32 %v788, 1.0
        %v846 = vadd.f32 %v790, 1.0
        %v847 = vadd.f32 %v792, 1.0
        %v848 = vadd.f32 %v794, 1.0
        %v849 = vadd.f32 %v796, 1.0
        %v850 = vadd.f32 %v798, 1.0
        %v851 = vadd.f32 %v800, 1.0
        %v852 = vadd.f32 %v802, 1.0
        %v853 = vadd.f32 %v804, 1.0
        %v854 = vadd.f32 %v806, 1.0
        %v855 = vadd.f32 %v808, 1.0
        %v856 = vadd.f32 %v810, 1.0
        %v857 = vadd.f32 %v812, 1.0
        %v858 = vadd.f32 %v814, 1.0
        %v859 = vadd.f32 %v816, 1.0
        %v860 = vadd.f32 %v818, 1.0
        %v861 = vadd.f32 %v820, 1.0
        %v862 = vadd.f32 %v822, 1.0
        %v863 = vadd.f32 %v824, 1.0
        %v864 = vadd.f32 %v826, 1.0
        %v865 = vadd.f32 %v828, 1.0
        %v866 = vadd.f32 %v830, 1.0
        %v867 = vadd.f32 %v832, 1.0
        %v868 = vadd.f32 %v834, 1.0
        %v869 = vadd.f32 %v836, 1.0
        %v870 = vadd.f32 %v838, 1.0
        %v871 = vrcp.pop %v839
        %v872 = vmul.f32 1.0, %v871
        %v873 = vrcp.pop %v840
        %v874 = vmul.f32 1.0, %v873
        %v875 = vrcp.pop %v841
        %v876 = vmul.f32 1.0, %v875
        %v877 = vrcp.pop %v842
        %v878 = vmul.f32 1.0, %v877
        %v879 = vrcp.pop %v843
        %v880 = vmul.f32 1.0, %v879
        %v881 = vrcp.pop %v844
        %v882 = vmul.f32 1.0, %v881
        %v883 = vrcp.pop %v845
        %v884 = vmul.f32 1.0, %v883
        %v885 = vrcp.pop %v846
        %v886 = vmul.f32 1.0, %v885
        %v887 = vrcp.pop %v847
        %v888 = vmul.f32 1.0, %v887
        %v889 = vrcp.pop %v848
        %v890 = vmul.f32 1.0, %v889
        %v891 = vrcp.pop %v849
        %v892 = vmul.f32 1.0, %v891
        %v893 = vrcp.pop %v850
        %v894 = vmul.f32 1.0, %v893
        %v895 = vrcp.pop %v851
        %v896 = vmul.f32 1.0, %v895
        %v897 = vrcp.pop %v852
        %v898 = vmul.f32 1.0, %v897
        %v899 = vrcp.pop %v853
        %v900 = vmul.f32 1.0, %v899
        %v901 = vrcp.pop %v854
        %v902 = vmul.f32 1.0, %v901
        %v903 = vrcp.pop %v855
        %v904 = vmul.f32 1.0, %v903
        %v905 = vrcp.pop %v856
        %v906 = vmul.f32 1.0, %v905
        %v907 = vrcp.pop %v857
        %v908 = vmul.f32 1.0, %v907
        %v909 = vrcp.pop %v858
        %v910 = vmul.f32 1.0, %v909
        %v911 = vrcp.pop %v859
        %v912 = vmul.f32 1.0, %v911
        %v913 = vrcp.pop %v860
        %v914 = vmul.f32 1.0, %v913
        %v915 = vrcp.pop %v861
        %v916 = vmul.f32 1.0, %v915
        %v917 = vrcp.pop %v862
        %v918 = vmul.f32 1.0, %v917
        %v919 = vrcp.pop %v863
        %v920 = vmul.f32 1.0, %v919
        %v921 = vrcp.pop %v864
        %v922 = vmul.f32 1.0, %v921
        %v923 = vrcp.pop %v865
        %v924 = vmul.f32 1.0, %v923
        %v925 = vrcp.pop %v866
        %v926 = vmul.f32 1.0, %v925
        %v927 = vrcp.pop %v867
        %v928 = vmul.f32 1.0, %v927
        %v929 = vrcp.pop %v868
        %v930 = vmul.f32 1.0, %v929
        %v931 = vrcp.pop %v869
        %v932 = vmul.f32 1.0, %v931
        %v933 = vrcp.pop %v870
        %v934 = vmul.f32 1.0, %v933
        %v935 = vmul.f32 %v617, %v872
        %v936 = vmul.f32 %v620, %v874
        %v937 = vmul.f32 %v625, %v876
        %v938 = vmul.f32 %v628, %v878
        %v939 = vmul.f32 %v633, %v880
        %v940 = vmul.f32 %v636, %v882
        %v941 = vmul.f32 %v641, %v884
        %v942 = vmul.f32 %v644, %v886
        %v943 = vmul.f32 %v649, %v888
        %v944 = vmul.f32 %v652, %v890
        %v945 = vmul.f32 %v657, %v892
        %v946 = vmul.f32 %v660, %v894
        %v947 = vmul.f32 %v665, %v896
        %v948 = vmul.f32 %v668, %v898
        %v949 = vmul.f32 %v673, %v900
        %v950 = vmul.f32 %v676, %v902
        %v951 = vmul.f32 %v681, %v904
        %v952 = vmul.f32 %v684, %v906
        %v953 = vmul.f32 %v689, %v908
        %v954 = vmul.f32 %v692, %v910
        %v955 = vmul.f32 %v697, %v912
        %v956 = vmul.f32 %v700, %v914
        %v957 = vmul.f32 %v705, %v916
        %v958 = vmul.f32 %v708, %v918
        %v959 = vmul.f32 %v713, %v920
        %v960 = vmul.f32 %v716, %v922
        %v961 = vmul.f32 %v721, %v924
        %v962 = vmul.f32 %v724, %v926
        %v963 = vmul.f32 %v729, %v928
        %v964 = vmul.f32 %v732, %v930
        %v965 = vmul.f32 %v737, %v932
        %v966 = vmul.f32 %v740, %v934
        %v967 = vadd.f32 %v935, %v936
        %v968 = vadd.f32 %v967, %v937
        %v969 = vadd.f32 %v968, %v938
        %v970 = vadd.f32 %v969, %v939
        %v971 = vadd.f32 %v970, %v940
        %v972 = vadd.f32 %v971, %v941
        %v973 = vadd.f32 %v972, %v942
        %v974 = vadd.f32 %v973, %v943
        %v975 = vadd.f32 %v974, %v944
        %v976 = vadd.f32 %v975, %v945
        %v977 = vadd.f32 %v976, %v946
        %v978 = vadd.f32 %v977, %v947
        %v979 = vadd.f32 %v978, %v948
        %v980 = vadd.f32 %v979, %v949
        %v981 = vadd.f32 %v980, %v950
        %v982 = vadd.f32 %v981, %v951
        %v983 = vadd.f32 %v982, %v952
        %v984 = vadd.f32 %v983, %v953
        %v985 = vadd.f32 %v984, %v954
        %v986 = vadd.f32 %v985, %v955
        %v987 = vadd.f32 %v986, %v956
        %v988 = vadd.f32 %v987, %v957
        %v989 = vadd.f32 %v988, %v958
        %v990 = vadd.f32 %v989, %v959
        %v991 = vadd.f32 %v990, %v960
        %v992 = vadd.f32 %v991, %v961
        %v993 = vadd.f32 %v992, %v962
        %v994 = vadd.f32 %v993, %v963
        %v995 = vadd.f32 %v994, %v964
        %v996 = vadd.f32 %v995, %v965
        %v997 = vadd.f32 %v996, %v966
        %v998 = vrot.slane %v997, 4
        %v999 = vadd.f32 %v997, %v998
        %v1000 = vrot.slane %v999, 2
        %v1001 = vadd.f32 %v999, %v1000
        %v1002 = vrot.slane %v1001, 1
        %v1003 = vadd.f32 %v1001, %v1002
        %v1004 = vrcp.pop 256.0
        %v1005 = vmul.f32 %v1003, %v1004
        %v1006 = vld [vmem:[%s3] sm:$0xff]
        %v1007 = vmul.f32 %v1005, %v1006
        %1008 = vadd.xlane.f32.xlu0 %v1007
        %v1009 = vpop.xlane.xlu0 %1008
        %v1010 = vld [vmem:[%s4] sm:$0xff]
        %v1011 = vadd.f32 %v1009, %v1010
        %v1012 = vmax.f32 %v1011, 0.0
        %v1013 = vld [vmem:[%s5] sm:$0xff]
        %1015 = vset.pattern.permute.xlu0 0
        %1016 = vperm.xlu0 %1015, %v1012
        %v1017 = vpop.permute.xlu0 %1016
        %v1019 = vmul.f32 %v1017, %v1013
        %v1020 = vrot.slane %v1019, 4
        %v1021 = vadd.f32 %v1019, %v1020
        %v1022 = vrot.slane %v1021, 2
        %v1023 = vadd.f32 %v1021, %v1022
        %v1024 = vrot.slane %v1023, 1
        %v1025 = vadd.f32 %v1023, %v1024
        %v1026 = vld [vmem:[%s6] sm:$0x1]
        %v1027 = vadd.f32 %v1025, %v1026
        %v1028 = vxor.u32 %v1027, 2147483648
        %v1029 = vmul.f32 %v1028, 1.442695
        %v1030 = vpow.pop %v1029
        %v1031 = vadd.f32 %v1030, 1.0
        %v1032 = vrcp.pop %v1031
        %v1033 = vmul.f32 1.0, %v1032
        %v1034 = vadd.f32 %v1033, 1.0
        %v1035 = vlaneseq
        %v1036 = vshrl.u32 %v1035, 7
        %v1037 = vsub.s32 0, %v1036
        %v1038 = vrot.slane %v1034, %v1037
        %v1039 = vmul.f32 %v935, %v1038
        %v1040 = vmul.f32 %v936, %v1038
        %v1041 = vmul.f32 %v937, %v1038
        %v1042 = vmul.f32 %v938, %v1038
        %v1043 = vmul.f32 %v939, %v1038
        %v1044 = vmul.f32 %v940, %v1038
        %v1045 = vmul.f32 %v941, %v1038
        %v1046 = vmul.f32 %v942, %v1038
        %v1047 = vmul.f32 %v943, %v1038
        %v1048 = vmul.f32 %v944, %v1038
        %v1049 = vmul.f32 %v945, %v1038
        %v1050 = vmul.f32 %v946, %v1038
        %v1051 = vmul.f32 %v947, %v1038
        %v1052 = vmul.f32 %v948, %v1038
        %v1053 = vmul.f32 %v949, %v1038
        %v1054 = vmul.f32 %v950, %v1038
        %v1055 = vmul.f32 %v951, %v1038
        %v1056 = vmul.f32 %v952, %v1038
        %v1057 = vmul.f32 %v953, %v1038
        %v1058 = vmul.f32 %v954, %v1038
        %v1059 = vmul.f32 %v955, %v1038
        %v1060 = vmul.f32 %v956, %v1038
        %v1061 = vmul.f32 %v957, %v1038
        %v1062 = vmul.f32 %v958, %v1038
        %v1063 = vmul.f32 %v959, %v1038
        %v1064 = vmul.f32 %v960, %v1038
        %v1065 = vmul.f32 %v961, %v1038
        %v1066 = vmul.f32 %v962, %v1038
        %v1067 = vmul.f32 %v963, %v1038
        %v1068 = vmul.f32 %v964, %v1038
        %v1069 = vmul.f32 %v965, %v1038
        %v1070 = vmul.f32 %v966, %v1038
        %1071 = vst [vmem:[%s271] sm:$0xff] %v1039
        %1072 = vst [vmem:[%s271 + $0x8] sm:$0xff] %v1040
        %1073 = vst [vmem:[%s271 + $0x10] sm:$0xff] %v1041
        %1074 = vst [vmem:[%s271 + $0x18] sm:$0xff] %v1042
        %1075 = vst [vmem:[%s271 + $0x20] sm:$0xff] %v1043
        %1076 = vst [vmem:[%s271 + $0x28] sm:$0xff] %v1044
        %1077 = vst [vmem:[%s271 + $0x30] sm:$0xff] %v1045
        %1078 = vst [vmem:[%s271 + $0x38] sm:$0xff] %v1046
        %1079 = vst [vmem:[%s271 + $0x40] sm:$0xff] %v1047
        %1080 = vst [vmem:[%s271 + $0x48] sm:$0xff] %v1048
        %1081 = vst [vmem:[%s271 + $0x50] sm:$0xff] %v1049
        %1082 = vst [vmem:[%s271 + $0x58] sm:$0xff] %v1050
        %1083 = vst [vmem:[%s271 + $0x60] sm:$0xff] %v1051
        %1084 = vst [vmem:[%s271 + $0x68] sm:$0xff] %v1052
        %1085 = vst [vmem:[%s271 + $0x70] sm:$0xff] %v1053
        %1086 = vst [vmem:[%s271 + $0x78] sm:$0xff] %v1054
        %1087 = vst [vmem:[%s271 + $0x80] sm:$0xff] %v1055
        %1088 = vst [vmem:[%s271 + $0x88] sm:$0xff] %v1056
        %1089 = vst [vmem:[%s271 + $0x90] sm:$0xff] %v1057
        %1090 = vst [vmem:[%s271 + $0x98] sm:$0xff] %v1058
        %1091 = vst [vmem:[%s271 + $0xa0] sm:$0xff] %v1059
        %1092 = vst [vmem:[%s271 + $0xa8] sm:$0xff] %v1060
        %1093 = vst [vmem:[%s271 + $0xb0] sm:$0xff] %v1061
        %1094 = vst [vmem:[%s271 + $0xb8] sm:$0xff] %v1062
        %1095 = vst [vmem:[%s271 + $0xc0] sm:$0xff] %v1063
        %1096 = vst [vmem:[%s271 + $0xc8] sm:$0xff] %v1064
        %1097 = vst [vmem:[%s271 + $0xd0] sm:$0xff] %v1065
        %1098 = vst [vmem:[%s271 + $0xd8] sm:$0xff] %v1066
        %1099 = vst [vmem:[%s271 + $0xe0] sm:$0xff] %v1067
        %1100 = vst [vmem:[%s271 + $0xe8] sm:$0xff] %v1068
        %1101 = vst [vmem:[%s271 + $0xf0] sm:$0xff] %v1069
        %1102 = vst [vmem:[%s271 + $0xf8] sm:$0xff] %v1070
        %s1103 = sand.u32 %s181, 1
        %s1104 = scalar_lea.sflag [#allocation3], %s1103
        %s1105 = sand.u32 %s181, 1
        %s1106 = smul.addr %s1105, 256
        %s1107 = scalar_lea.vmem [#allocation2], %s1106
        // Predicated region
        $region49: #{tpu_custom_call.1} parent=47 // pred_check
          %p1108 = pneg %p191
        $region50: #{tpu_custom_call.1} parent=47 // pred_check_branch
          %1110 = sbr.rel (%p1108) target = $region52
        $region51: #{tpu_custom_call.1} parent=47 // pred_region
          %s1112 = ssub.s32 4096, 4096
          %1113 = vsyncadd %s1104, %s1112
          %s1114 = smul.addr %s21, 32
          %s1115 = smul.addr %s1114, 128
          %s1116 = scalar_lea.hbm %s7, %s1115
          %s1117 = sshll.u32 %s1107, 4
          %s1118 = int_to_ptr.vmem [resolvable:$true] %s1117
          %1123 = dma.vmem_to_hbm [thread:$0]  %s1118, 4096, %s1116, %s1104, 128, 128, 8
        $region52: #{tpu_custom_call.1} parent=47 // pred_fallthru
          _
      $region48: #{tpu_custom_call.1} parent=5 // pred_fallthru
        _
      %p1124 = scmp.le.s32.totalorder 2, %s16
      // Predicated region
      $region53: #{tpu_custom_call.1} parent=5 // pred_check
        %p1125 = pneg %p1124
      $region54: #{tpu_custom_call.1} parent=5 // pred_check_branch
        %1127 = sbr.rel (%p1125) target = $region56
      $region55: #{tpu_custom_call.1} parent=5 // pred_region
        %s1128 = ssub.s32 %s16, 2
        // Predicated region
        $region57: #{tpu_custom_call.1} parent=55 // pred_check
          %p1129 = pneg %p197
        $region58: #{tpu_custom_call.1} parent=55 // pred_check_branch
          %1131 = sbr.rel (%p1129) target = $region60
        $region59: #{tpu_custom_call.1} parent=55 // pred_region
          %s1132 = sand.u32 %s182, 1
          %s1133 = scalar_lea.sflag [#allocation3], %s1132
          %s1134 = sand.u32 %s182, 1
          %s1135 = smul.addr %s1134, 256
          %s1136 = scalar_lea.vmem [#allocation2], %s1135
          %1137 = dma.done %s1133, 4096
        $region60: #{tpu_custom_call.1} parent=55 // pred_fallthru
          _
      $region56: #{tpu_custom_call.1} parent=5 // pred_fallthru
        _
    $region6: #{tpu_custom_call.1} parent=1 // loop_footer
      %s20 = sadd.s32 1, %s16
    $region7: #{tpu_custom_call.1} parent=1 // loop_footer_branch
      %15 = sbr.rel target = $region3
    $region8: #{tpu_custom_call.1} parent=1 // loop_exit
      _
    %1138 = vsyncpa [#allocation3], 1
    %s1139 = scalar_lea.sflag [#allocation3], 1
    %1140 = vsyncpa %s1139, 1

</llo_original>
